<compile_context>
chip_gen: v5e
topology: v5e:2x2
jax: 0.10.0
libtpu: 0.0.40
codegen_flags: <defaults>
</compile_context>

<pallas_src>
import jax
import jax.numpy as jnp
from jax.experimental import pallas as pl
from jax.experimental.pallas import tpu as pltpu

IN_CH = 4
OUT_CH = 32
PATCH = 2            # patch_size (conv stride)
K = 11               # kernel_size
PAD = K // 2
EPS = 1e-6

NT = (K + 1) // 2            # 6 tap-pair windows (even/odd phase share a window)
NW = NT * 2 * IN_CH          # 48 rows of packed proj weights
PARAM_ROWS = 64              # packed params padded to a sublane-friendly row count


def _pick_bt(B, l_half, l_out):
    """Batches per grid step: ~2 MiB of in+out block per step, >=2 steps if B>=2."""
    per_b = 4 * (l_half * 2 * IN_CH + l_out * OUT_CH)     # f32 bytes per batch
    budget = 2 << 20
    bt = max(1, min(B, budget // max(per_b, 1)))
    if B >= 2:
        bt = min(bt, max(1, B // 2))      # keep both v7x TensorCores busy
    while B % bt:                          # exact tiling of the batch axis
        bt -= 1
    return bt


def _make_kernel(l_out, bt):
    def kernel(x_ref, p_ref, o_ref):
        # x_ref : (bt, l_half, 2*IN_CH)  phase-split padded input (time on sublane)
        # p_ref : (PARAM_ROWS, OUT_CH)   packed parameters
        # o_ref : (bt, l_out, OUT_CH)
        params = p_ref[...]
        proj_b = params[NW:NW + 1, :]                       # (1, OUT_CH)
        pa_b = params[NW + 1 + K:NW + 2 + K, :]             # (1, OUT_CH)
        gamma = params[NW + 2 + K:NW + 3 + K, :]            # (1, OUT_CH)
        beta = params[NW + 3 + K:NW + 4 + K, :]             # (1, OUT_CH)

        # proj weight taps (static slices -> zero runtime cost)
        wks = [params[2 * IN_CH * m:2 * IN_CH * (m + 1), :] for m in range(NT)]

        # PA edge masks folded into per-tap weight planes; hoisted out of the
        # batch loop (JAX does not CSE broadcast_in_dim).
        t_idx = jax.lax.broadcasted_iota(jnp.int32, (l_out, 1), 0)
        wmask = []
        for k in range(K):
            d = k - PAD
            valid = (t_idx + d >= 0) & (t_idx + d < l_out)   # (l_out, 1)
            pw_k = params[NW + 1 + k:NW + 2 + k, :]          # (1, OUT_CH)
            wmask.append(jnp.where(valid, pw_k, 0.0))        # (l_out, OUT_CH)

        proj_b_plane = jnp.zeros((l_out, OUT_CH), jnp.float32) + proj_b
        pa_b_plane = jnp.zeros((l_out, OUT_CH), jnp.float32) + pa_b

        for i in range(bt):                                  # static unroll over batch
            # ---- proj: strided Conv1d as 6 accumulated MXU matmuls over
            #      contiguous shifted windows of the phase-split input ----
            y = proj_b_plane
            for m in range(NT):
                xs = x_ref[i, pl.ds(m, l_out), :]            # (l_out, 2*IN_CH)
                y = y + jnp.dot(xs, wks[m], preferred_element_type=jnp.float32)

            # ---- PA: depthwise conv via XLU sublane rolls + pre-masked
            #      per-tap weight planes, then sigmoid gate ----
            conv = pa_b_plane
            for k in range(K):
                d = k - PAD
                shifted = pltpu.roll(y, shift=(-d) % l_out, axis=0) if d != 0 else y
                conv = conv + shifted * wmask[k]
            z = y * jax.nn.sigmoid(conv)                     # (l_out, OUT_CH)

            # ---- LayerNorm over the channel (lane) axis, eps=1e-6 ----
            mean = jnp.mean(z, axis=-1, keepdims=True)
            var = jnp.mean((z - mean) ** 2, axis=-1, keepdims=True)
            zn = (z - mean) * jax.lax.rsqrt(var + EPS)
            o_ref[i] = (zn * gamma + beta).astype(o_ref.dtype)

    return kernel


def patch_embed(x, proj_w, proj_b, pa_w, pa_b, gamma, beta):
    """x: (B, C, L) float32 (NCL).  Returns ((B, l_out, OUT_CH), L // PATCH)."""
    B, C, L = x.shape
    assert C == IN_CH
    l_out = (L + 2 * PAD - K) // PATCH + 1
    l_half = l_out + PAD
    lp2 = 2 * l_half
    right_pad = lp2 - L - PAD

    # ---- input plumbing only (no K-fold expansion): pad + even/odd phase split
    #      x_ph[b, m, p*C + c] = x_padded[b, c, 2*m + p] ----
    x_pad = jnp.pad(x, ((0, 0), (0, 0), (PAD, right_pad)))          # (B, C, lp2)
    x_ph = x_pad.transpose(0, 2, 1).reshape(B, l_half, 2 * IN_CH)   # (B, l_half, 8)

    # ---- pack ALL small parameters into one (64, OUT_CH) operand ----
    # proj weight regrouped so window m contracts taps k=2m (phase 0) and
    # k=2m+1 (phase 1):  w_stack[m*2C + p*C + c, o] = proj_w[o, c, 2m + p]
    w_t = jnp.transpose(proj_w, (2, 1, 0))                           # (K, C, OUT)
    w_t = jnp.pad(w_t, ((0, 2 * NT - K), (0, 0), (0, 0)))            # (12, C, OUT)
    w_stack = w_t.reshape(NW, OUT_CH)                                # (48, OUT)
    params = jnp.concatenate([
        w_stack,
        proj_b.reshape(1, OUT_CH),
        pa_w[:, 0, :].T,                                             # (K, OUT)
        pa_b.reshape(1, OUT_CH),
        gamma.reshape(1, OUT_CH),
        beta.reshape(1, OUT_CH),
    ], axis=0)
    params = jnp.pad(params, ((0, PARAM_ROWS - params.shape[0]), (0, 0)))

    bt = _pick_bt(B, l_half, l_out)
    grid = (B // bt,)

    out = pl.pallas_call(
        _make_kernel(l_out=l_out, bt=bt),
        out_shape=jax.ShapeDtypeStruct((B, l_out, OUT_CH), jnp.float32),
        grid_spec=pltpu.PrefetchScalarGridSpec(
            num_scalar_prefetch=0,
            grid=grid,
            in_specs=[
                pl.BlockSpec((bt, l_half, 2 * IN_CH), lambda g: (g, 0, 0)),
                pl.BlockSpec((PARAM_ROWS, OUT_CH), lambda g: (0, 0)),
            ],
            out_specs=pl.BlockSpec((bt, l_out, OUT_CH), lambda g: (g, 0, 0)),
        ),
        compiler_params=pltpu.CompilerParams(
            dimension_semantics=("parallel",)),
    )(x_ph, params)
    return out, L // PATCH


def _reference(x, proj_w, proj_b, pa_w, pa_b, gamma, beta):
    """Pure-JAX reference mirroring the PyTorch module."""
    y = jax.lax.conv_general_dilated(
        x, proj_w, window_strides=(PATCH,), padding=((PAD, PAD),),
        dimension_numbers=("NCH", "OIH", "NCH")) + proj_b[None, :, None]
    g = jax.lax.conv_general_dilated(
        y, pa_w, window_strides=(1,), padding=((PAD, PAD),),
        feature_group_count=OUT_CH,
        dimension_numbers=("NCH", "OIH", "NCH")) + pa_b[None, :, None]
    z = y * jax.nn.sigmoid(g)
    z = z.transpose(0, 2, 1)                              # (B, L_out, OUT_CH)
    mean = z.mean(-1, keepdims=True)
    var = ((z - mean) ** 2).mean(-1, keepdims=True)
    return (z - mean) / jnp.sqrt(var + EPS) * gamma + beta


if __name__ == "__main__":
    key = jax.random.PRNGKey(0)
    k1, k2, k3, k4, kx = jax.random.split(key, 5)

    # deterministic synthetic parameters (shapes per nn.Module __init__)
    proj_w = 0.1 * jax.random.normal(k1, (OUT_CH, IN_CH, K), jnp.float32)
    proj_b = 0.1 * jax.random.normal(k2, (OUT_CH,), jnp.float32)
    pa_w = 0.1 * jax.random.normal(k3, (OUT_CH, 1, K), jnp.float32)
    pa_b = 0.1 * jax.random.normal(k4, (OUT_CH,), jnp.float32)
    gamma = jnp.ones((OUT_CH,), jnp.float32)
    beta = jnp.zeros((OUT_CH,), jnp.float32)

    x = jax.random.normal(kx, (2, IN_CH, 16), jnp.float32)   # (B, C, L)

    out, l_new = patch_embed(x, proj_w, proj_b, pa_w, pa_b, gamma, beta)
    out = jax.block_until_ready(out)

    ref = _reference(x, proj_w, proj_b, pa_w, pa_b, gamma, beta)
    assert out.shape == (2, 16 // PATCH, OUT_CH)
    assert l_new == 16 // PATCH
    assert bool(jnp.allclose(out, ref, atol=1e-4, rtol=1e-4))

    print("KERNEL_OK")
</pallas_src>

<mosaic_0001>
module attributes {stable_mosaic.version = 11 : i64} {
  func.func @kernel(%arg0: i32, %arg1: memref<1x13x8xf32, #tpu.memory_space<vmem>>, %arg2: memref<64x32xf32, #tpu.memory_space<vmem>>, %arg3: memref<1x8x32xf32, #tpu.memory_space<vmem>>) attributes {dimension_semantics = [#tpu.dimension_semantics<parallel>], iteration_bounds = array<i64: 2>, scalar_prefetch = 0 : i64, scratch_operands = 0 : i64, tpu.core_type = #tpu.core_type<tc>, window_params = [{transform_indices = @transform_0, window_bounds = array<i64: 1, 13, 8>}, {pipeline_mode = #tpu.pipeline_mode<synchronous>, transform_indices = @transform_1, window_bounds = array<i64: 64, 32>}, {transform_indices = @transform_2, window_bounds = array<i64: 1, 8, 32>}]} {
    %c0 = arith.constant 0 : index
    %c0_0 = arith.constant 0 : index
    %0 = vector.load %arg2[%c0, %c0_0] : memref<64x32xf32, #tpu.memory_space<vmem>>, vector<64x32xf32>
    %1 = vector.extract_strided_slice %0 {offsets = [48, 0], sizes = [1, 32], strides = [1, 1]} : vector<64x32xf32> to vector<1x32xf32>
    %2 = vector.extract_strided_slice %0 {offsets = [60, 0], sizes = [1, 32], strides = [1, 1]} : vector<64x32xf32> to vector<1x32xf32>
    %3 = vector.extract_strided_slice %0 {offsets = [61, 0], sizes = [1, 32], strides = [1, 1]} : vector<64x32xf32> to vector<1x32xf32>
    %4 = vector.extract_strided_slice %0 {offsets = [62, 0], sizes = [1, 32], strides = [1, 1]} : vector<64x32xf32> to vector<1x32xf32>
    %5 = vector.extract_strided_slice %0 {offsets = [0, 0], sizes = [8, 32], strides = [1, 1]} : vector<64x32xf32> to vector<8x32xf32>
    %6 = vector.extract_strided_slice %0 {offsets = [8, 0], sizes = [8, 32], strides = [1, 1]} : vector<64x32xf32> to vector<8x32xf32>
    %7 = vector.extract_strided_slice %0 {offsets = [16, 0], sizes = [8, 32], strides = [1, 1]} : vector<64x32xf32> to vector<8x32xf32>
    %8 = vector.extract_strided_slice %0 {offsets = [24, 0], sizes = [8, 32], strides = [1, 1]} : vector<64x32xf32> to vector<8x32xf32>
    %9 = vector.extract_strided_slice %0 {offsets = [32, 0], sizes = [8, 32], strides = [1, 1]} : vector<64x32xf32> to vector<8x32xf32>
    %10 = vector.extract_strided_slice %0 {offsets = [40, 0], sizes = [8, 32], strides = [1, 1]} : vector<64x32xf32> to vector<8x32xf32>
    %11 = tpu.iota {dimensions = array<i32: 0>} : vector<8x1xi32>
    %c-5_i32 = arith.constant -5 : i32
    %12 = vector.broadcast %c-5_i32 : i32 to vector<8x1xi32>
    %13 = arith.addi %11, %12 : vector<8x1xi32>
    %c0_i32 = arith.constant 0 : i32
    %14 = vector.broadcast %c0_i32 : i32 to vector<8x1xi32>
    %15 = arith.cmpi sge, %13, %14 : vector<8x1xi32>
    %c-5_i32_1 = arith.constant -5 : i32
    %16 = vector.broadcast %c-5_i32_1 : i32 to vector<8x1xi32>
    %17 = arith.addi %11, %16 : vector<8x1xi32>
    %c8_i32 = arith.constant 8 : i32
    %18 = vector.broadcast %c8_i32 : i32 to vector<8x1xi32>
    %19 = arith.cmpi slt, %17, %18 : vector<8x1xi32>
    %20 = arith.andi %15, %19 : vector<8x1xi1>
    %21 = vector.extract_strided_slice %0 {offsets = [49, 0], sizes = [1, 32], strides = [1, 1]} : vector<64x32xf32> to vector<1x32xf32>
    %cst = arith.constant 0.000000e+00 : f32
    %22 = vector.shape_cast %20 : vector<8x1xi1> to vector<8x1xi1>
    %23 = vector.broadcast %22 : vector<8x1xi1> to vector<8x32xi1>
    %24 = vector.shape_cast %21 : vector<1x32xf32> to vector<1x32xf32>
    %25 = vector.broadcast %24 : vector<1x32xf32> to vector<8x32xf32>
    %26 = vector.broadcast %cst : f32 to vector<8x32xf32>
    %27 = arith.select %23, %25, %26 : vector<8x32xi1>, vector<8x32xf32>
    %c-4_i32 = arith.constant -4 : i32
    %28 = vector.broadcast %c-4_i32 : i32 to vector<8x1xi32>
    %29 = arith.addi %11, %28 : vector<8x1xi32>
    %c0_i32_2 = arith.constant 0 : i32
    %30 = vector.broadcast %c0_i32_2 : i32 to vector<8x1xi32>
    %31 = arith.cmpi sge, %29, %30 : vector<8x1xi32>
    %c-4_i32_3 = arith.constant -4 : i32
    %32 = vector.broadcast %c-4_i32_3 : i32 to vector<8x1xi32>
    %33 = arith.addi %11, %32 : vector<8x1xi32>
    %c8_i32_4 = arith.constant 8 : i32
    %34 = vector.broadcast %c8_i32_4 : i32 to vector<8x1xi32>
    %35 = arith.cmpi slt, %33, %34 : vector<8x1xi32>
    %36 = arith.andi %31, %35 : vector<8x1xi1>
    %37 = vector.extract_strided_slice %0 {offsets = [50, 0], sizes = [1, 32], strides = [1, 1]} : vector<64x32xf32> to vector<1x32xf32>
    %cst_5 = arith.constant 0.000000e+00 : f32
    %38 = vector.shape_cast %36 : vector<8x1xi1> to vector<8x1xi1>
    %39 = vector.broadcast %38 : vector<8x1xi1> to vector<8x32xi1>
    %40 = vector.shape_cast %37 : vector<1x32xf32> to vector<1x32xf32>
    %41 = vector.broadcast %40 : vector<1x32xf32> to vector<8x32xf32>
    %42 = vector.broadcast %cst_5 : f32 to vector<8x32xf32>
    %43 = arith.select %39, %41, %42 : vector<8x32xi1>, vector<8x32xf32>
    %c-3_i32 = arith.constant -3 : i32
    %44 = vector.broadcast %c-3_i32 : i32 to vector<8x1xi32>
    %45 = arith.addi %11, %44 : vector<8x1xi32>
    %c0_i32_6 = arith.constant 0 : i32
    %46 = vector.broadcast %c0_i32_6 : i32 to vector<8x1xi32>
    %47 = arith.cmpi sge, %45, %46 : vector<8x1xi32>
    %c-3_i32_7 = arith.constant -3 : i32
    %48 = vector.broadcast %c-3_i32_7 : i32 to vector<8x1xi32>
    %49 = arith.addi %11, %48 : vector<8x1xi32>
    %c8_i32_8 = arith.constant 8 : i32
    %50 = vector.broadcast %c8_i32_8 : i32 to vector<8x1xi32>
    %51 = arith.cmpi slt, %49, %50 : vector<8x1xi32>
    %52 = arith.andi %47, %51 : vector<8x1xi1>
    %53 = vector.extract_strided_slice %0 {offsets = [51, 0], sizes = [1, 32], strides = [1, 1]} : vector<64x32xf32> to vector<1x32xf32>
    %cst_9 = arith.constant 0.000000e+00 : f32
    %54 = vector.shape_cast %52 : vector<8x1xi1> to vector<8x1xi1>
    %55 = vector.broadcast %54 : vector<8x1xi1> to vector<8x32xi1>
    %56 = vector.shape_cast %53 : vector<1x32xf32> to vector<1x32xf32>
    %57 = vector.broadcast %56 : vector<1x32xf32> to vector<8x32xf32>
    %58 = vector.broadcast %cst_9 : f32 to vector<8x32xf32>
    %59 = arith.select %55, %57, %58 : vector<8x32xi1>, vector<8x32xf32>
    %c-2_i32 = arith.constant -2 : i32
    %60 = vector.broadcast %c-2_i32 : i32 to vector<8x1xi32>
    %61 = arith.addi %11, %60 : vector<8x1xi32>
    %c0_i32_10 = arith.constant 0 : i32
    %62 = vector.broadcast %c0_i32_10 : i32 to vector<8x1xi32>
    %63 = arith.cmpi sge, %61, %62 : vector<8x1xi32>
    %c-2_i32_11 = arith.constant -2 : i32
    %64 = vector.broadcast %c-2_i32_11 : i32 to vector<8x1xi32>
    %65 = arith.addi %11, %64 : vector<8x1xi32>
    %c8_i32_12 = arith.constant 8 : i32
    %66 = vector.broadcast %c8_i32_12 : i32 to vector<8x1xi32>
    %67 = arith.cmpi slt, %65, %66 : vector<8x1xi32>
    %68 = arith.andi %63, %67 : vector<8x1xi1>
    %69 = vector.extract_strided_slice %0 {offsets = [52, 0], sizes = [1, 32], strides = [1, 1]} : vector<64x32xf32> to vector<1x32xf32>
    %cst_13 = arith.constant 0.000000e+00 : f32
    %70 = vector.shape_cast %68 : vector<8x1xi1> to vector<8x1xi1>
    %71 = vector.broadcast %70 : vector<8x1xi1> to vector<8x32xi1>
    %72 = vector.shape_cast %69 : vector<1x32xf32> to vector<1x32xf32>
    %73 = vector.broadcast %72 : vector<1x32xf32> to vector<8x32xf32>
    %74 = vector.broadcast %cst_13 : f32 to vector<8x32xf32>
    %75 = arith.select %71, %73, %74 : vector<8x32xi1>, vector<8x32xf32>
    %c-1_i32 = arith.constant -1 : i32
    %76 = vector.broadcast %c-1_i32 : i32 to vector<8x1xi32>
    %77 = arith.addi %11, %76 : vector<8x1xi32>
    %c0_i32_14 = arith.constant 0 : i32
    %78 = vector.broadcast %c0_i32_14 : i32 to vector<8x1xi32>
    %79 = arith.cmpi sge, %77, %78 : vector<8x1xi32>
    %c-1_i32_15 = arith.constant -1 : i32
    %80 = vector.broadcast %c-1_i32_15 : i32 to vector<8x1xi32>
    %81 = arith.addi %11, %80 : vector<8x1xi32>
    %c8_i32_16 = arith.constant 8 : i32
    %82 = vector.broadcast %c8_i32_16 : i32 to vector<8x1xi32>
    %83 = arith.cmpi slt, %81, %82 : vector<8x1xi32>
    %84 = arith.andi %79, %83 : vector<8x1xi1>
    %85 = vector.extract_strided_slice %0 {offsets = [53, 0], sizes = [1, 32], strides = [1, 1]} : vector<64x32xf32> to vector<1x32xf32>
    %cst_17 = arith.constant 0.000000e+00 : f32
    %86 = vector.shape_cast %84 : vector<8x1xi1> to vector<8x1xi1>
    %87 = vector.broadcast %86 : vector<8x1xi1> to vector<8x32xi1>
    %88 = vector.shape_cast %85 : vector<1x32xf32> to vector<1x32xf32>
    %89 = vector.broadcast %88 : vector<1x32xf32> to vector<8x32xf32>
    %90 = vector.broadcast %cst_17 : f32 to vector<8x32xf32>
    %91 = arith.select %87, %89, %90 : vector<8x32xi1>, vector<8x32xf32>
    %c0_i32_18 = arith.constant 0 : i32
    %92 = vector.broadcast %c0_i32_18 : i32 to vector<8x1xi32>
    %93 = arith.addi %11, %92 : vector<8x1xi32>
    %c0_i32_19 = arith.constant 0 : i32
    %94 = vector.broadcast %c0_i32_19 : i32 to vector<8x1xi32>
    %95 = arith.cmpi sge, %93, %94 : vector<8x1xi32>
    %c0_i32_20 = arith.constant 0 : i32
    %96 = vector.broadcast %c0_i32_20 : i32 to vector<8x1xi32>
    %97 = arith.addi %11, %96 : vector<8x1xi32>
    %c8_i32_21 = arith.constant 8 : i32
    %98 = vector.broadcast %c8_i32_21 : i32 to vector<8x1xi32>
    %99 = arith.cmpi slt, %97, %98 : vector<8x1xi32>
    %100 = arith.andi %95, %99 : vector<8x1xi1>
    %101 = vector.extract_strided_slice %0 {offsets = [54, 0], sizes = [1, 32], strides = [1, 1]} : vector<64x32xf32> to vector<1x32xf32>
    %cst_22 = arith.constant 0.000000e+00 : f32
    %102 = vector.shape_cast %100 : vector<8x1xi1> to vector<8x1xi1>
    %103 = vector.broadcast %102 : vector<8x1xi1> to vector<8x32xi1>
    %104 = vector.shape_cast %101 : vector<1x32xf32> to vector<1x32xf32>
    %105 = vector.broadcast %104 : vector<1x32xf32> to vector<8x32xf32>
    %106 = vector.broadcast %cst_22 : f32 to vector<8x32xf32>
    %107 = arith.select %103, %105, %106 : vector<8x32xi1>, vector<8x32xf32>
    %c1_i32 = arith.constant 1 : i32
    %108 = vector.broadcast %c1_i32 : i32 to vector<8x1xi32>
    %109 = arith.addi %11, %108 : vector<8x1xi32>
    %c0_i32_23 = arith.constant 0 : i32
    %110 = vector.broadcast %c0_i32_23 : i32 to vector<8x1xi32>
    %111 = arith.cmpi sge, %109, %110 : vector<8x1xi32>
    %c1_i32_24 = arith.constant 1 : i32
    %112 = vector.broadcast %c1_i32_24 : i32 to vector<8x1xi32>
    %113 = arith.addi %11, %112 : vector<8x1xi32>
    %c8_i32_25 = arith.constant 8 : i32
    %114 = vector.broadcast %c8_i32_25 : i32 to vector<8x1xi32>
    %115 = arith.cmpi slt, %113, %114 : vector<8x1xi32>
    %116 = arith.andi %111, %115 : vector<8x1xi1>
    %117 = vector.extract_strided_slice %0 {offsets = [55, 0], sizes = [1, 32], strides = [1, 1]} : vector<64x32xf32> to vector<1x32xf32>
    %cst_26 = arith.constant 0.000000e+00 : f32
    %118 = vector.shape_cast %116 : vector<8x1xi1> to vector<8x1xi1>
    %119 = vector.broadcast %118 : vector<8x1xi1> to vector<8x32xi1>
    %120 = vector.shape_cast %117 : vector<1x32xf32> to vector<1x32xf32>
    %121 = vector.broadcast %120 : vector<1x32xf32> to vector<8x32xf32>
    %122 = vector.broadcast %cst_26 : f32 to vector<8x32xf32>
    %123 = arith.select %119, %121, %122 : vector<8x32xi1>, vector<8x32xf32>
    %c2_i32 = arith.constant 2 : i32
    %124 = vector.broadcast %c2_i32 : i32 to vector<8x1xi32>
    %125 = arith.addi %11, %124 : vector<8x1xi32>
    %c0_i32_27 = arith.constant 0 : i32
    %126 = vector.broadcast %c0_i32_27 : i32 to vector<8x1xi32>
    %127 = arith.cmpi sge, %125, %126 : vector<8x1xi32>
    %c2_i32_28 = arith.constant 2 : i32
    %128 = vector.broadcast %c2_i32_28 : i32 to vector<8x1xi32>
    %129 = arith.addi %11, %128 : vector<8x1xi32>
    %c8_i32_29 = arith.constant 8 : i32
    %130 = vector.broadcast %c8_i32_29 : i32 to vector<8x1xi32>
    %131 = arith.cmpi slt, %129, %130 : vector<8x1xi32>
    %132 = arith.andi %127, %131 : vector<8x1xi1>
    %133 = vector.extract_strided_slice %0 {offsets = [56, 0], sizes = [1, 32], strides = [1, 1]} : vector<64x32xf32> to vector<1x32xf32>
    %cst_30 = arith.constant 0.000000e+00 : f32
    %134 = vector.shape_cast %132 : vector<8x1xi1> to vector<8x1xi1>
    %135 = vector.broadcast %134 : vector<8x1xi1> to vector<8x32xi1>
    %136 = vector.shape_cast %133 : vector<1x32xf32> to vector<1x32xf32>
    %137 = vector.broadcast %136 : vector<1x32xf32> to vector<8x32xf32>
    %138 = vector.broadcast %cst_30 : f32 to vector<8x32xf32>
    %139 = arith.select %135, %137, %138 : vector<8x32xi1>, vector<8x32xf32>
    %c3_i32 = arith.constant 3 : i32
    %140 = vector.broadcast %c3_i32 : i32 to vector<8x1xi32>
    %141 = arith.addi %11, %140 : vector<8x1xi32>
    %c0_i32_31 = arith.constant 0 : i32
    %142 = vector.broadcast %c0_i32_31 : i32 to vector<8x1xi32>
    %143 = arith.cmpi sge, %141, %142 : vector<8x1xi32>
    %c3_i32_32 = arith.constant 3 : i32
    %144 = vector.broadcast %c3_i32_32 : i32 to vector<8x1xi32>
    %145 = arith.addi %11, %144 : vector<8x1xi32>
    %c8_i32_33 = arith.constant 8 : i32
    %146 = vector.broadcast %c8_i32_33 : i32 to vector<8x1xi32>
    %147 = arith.cmpi slt, %145, %146 : vector<8x1xi32>
    %148 = arith.andi %143, %147 : vector<8x1xi1>
    %149 = vector.extract_strided_slice %0 {offsets = [57, 0], sizes = [1, 32], strides = [1, 1]} : vector<64x32xf32> to vector<1x32xf32>
    %cst_34 = arith.constant 0.000000e+00 : f32
    %150 = vector.shape_cast %148 : vector<8x1xi1> to vector<8x1xi1>
    %151 = vector.broadcast %150 : vector<8x1xi1> to vector<8x32xi1>
    %152 = vector.shape_cast %149 : vector<1x32xf32> to vector<1x32xf32>
    %153 = vector.broadcast %152 : vector<1x32xf32> to vector<8x32xf32>
    %154 = vector.broadcast %cst_34 : f32 to vector<8x32xf32>
    %155 = arith.select %151, %153, %154 : vector<8x32xi1>, vector<8x32xf32>
    %c4_i32 = arith.constant 4 : i32
    %156 = vector.broadcast %c4_i32 : i32 to vector<8x1xi32>
    %157 = arith.addi %11, %156 : vector<8x1xi32>
    %c0_i32_35 = arith.constant 0 : i32
    %158 = vector.broadcast %c0_i32_35 : i32 to vector<8x1xi32>
    %159 = arith.cmpi sge, %157, %158 : vector<8x1xi32>
    %c4_i32_36 = arith.constant 4 : i32
    %160 = vector.broadcast %c4_i32_36 : i32 to vector<8x1xi32>
    %161 = arith.addi %11, %160 : vector<8x1xi32>
    %c8_i32_37 = arith.constant 8 : i32
    %162 = vector.broadcast %c8_i32_37 : i32 to vector<8x1xi32>
    %163 = arith.cmpi slt, %161, %162 : vector<8x1xi32>
    %164 = arith.andi %159, %163 : vector<8x1xi1>
    %165 = vector.extract_strided_slice %0 {offsets = [58, 0], sizes = [1, 32], strides = [1, 1]} : vector<64x32xf32> to vector<1x32xf32>
    %cst_38 = arith.constant 0.000000e+00 : f32
    %166 = vector.shape_cast %164 : vector<8x1xi1> to vector<8x1xi1>
    %167 = vector.broadcast %166 : vector<8x1xi1> to vector<8x32xi1>
    %168 = vector.shape_cast %165 : vector<1x32xf32> to vector<1x32xf32>
    %169 = vector.broadcast %168 : vector<1x32xf32> to vector<8x32xf32>
    %170 = vector.broadcast %cst_38 : f32 to vector<8x32xf32>
    %171 = arith.select %167, %169, %170 : vector<8x32xi1>, vector<8x32xf32>
    %c5_i32 = arith.constant 5 : i32
    %172 = vector.broadcast %c5_i32 : i32 to vector<8x1xi32>
    %173 = arith.addi %11, %172 : vector<8x1xi32>
    %c0_i32_39 = arith.constant 0 : i32
    %174 = vector.broadcast %c0_i32_39 : i32 to vector<8x1xi32>
    %175 = arith.cmpi sge, %173, %174 : vector<8x1xi32>
    %c5_i32_40 = arith.constant 5 : i32
    %176 = vector.broadcast %c5_i32_40 : i32 to vector<8x1xi32>
    %177 = arith.addi %11, %176 : vector<8x1xi32>
    %c8_i32_41 = arith.constant 8 : i32
    %178 = vector.broadcast %c8_i32_41 : i32 to vector<8x1xi32>
    %179 = arith.cmpi slt, %177, %178 : vector<8x1xi32>
    %180 = arith.andi %175, %179 : vector<8x1xi1>
    %181 = vector.extract_strided_slice %0 {offsets = [59, 0], sizes = [1, 32], strides = [1, 1]} : vector<64x32xf32> to vector<1x32xf32>
    %cst_42 = arith.constant 0.000000e+00 : f32
    %182 = vector.shape_cast %180 : vector<8x1xi1> to vector<8x1xi1>
    %183 = vector.broadcast %182 : vector<8x1xi1> to vector<8x32xi1>
    %184 = vector.shape_cast %181 : vector<1x32xf32> to vector<1x32xf32>
    %185 = vector.broadcast %184 : vector<1x32xf32> to vector<8x32xf32>
    %186 = vector.broadcast %cst_42 : f32 to vector<8x32xf32>
    %187 = arith.select %183, %185, %186 : vector<8x32xi1>, vector<8x32xf32>
    %cst_43 = arith.constant 0.000000e+00 : f32
    %188 = vector.broadcast %cst_43 : f32 to vector<8x32xf32>
    %189 = vector.broadcast %1 : vector<1x32xf32> to vector<8x32xf32>
    %190 = arith.addf %188, %189 : vector<8x32xf32>
    %cst_44 = arith.constant 0.000000e+00 : f32
    %191 = vector.broadcast %cst_44 : f32 to vector<8x32xf32>
    %192 = vector.broadcast %2 : vector<1x32xf32> to vector<8x32xf32>
    %193 = arith.addf %191, %192 : vector<8x32xf32>
    %c0_45 = arith.constant 0 : index
    %c0_46 = arith.constant 0 : index
    %c0_47 = arith.constant 0 : index
    %194 = vector.load %arg1[%c0_45, %c0_46, %c0_47] : memref<1x13x8xf32, #tpu.memory_space<vmem>>, vector<1x8x8xf32>
    %195 = vector.shape_cast %194 : vector<1x8x8xf32> to vector<8x8xf32>
    %cst_48 = arith.constant dense<0.000000e+00> : vector<8x32xf32>
    %196 = tpu.matmul %195, %5, %cst_48 {dimension_numbers = #tpu.dot_dimension_numbers<[1], [0], [0], [1], [0, 0, 1, 1], [], []>} : vector<8x8xf32>, vector<8x32xf32>, vector<8x32xf32> -> vector<8x32xf32>
    %197 = arith.addf %190, %196 : vector<8x32xf32>
    %c0_49 = arith.constant 0 : index
    %c1 = arith.constant 1 : index
    %c0_50 = arith.constant 0 : index
    %198 = vector.load %arg1[%c0_49, %c1, %c0_50] : memref<1x13x8xf32, #tpu.memory_space<vmem>>, vector<1x8x8xf32>
    %199 = vector.shape_cast %198 : vector<1x8x8xf32> to vector<8x8xf32>
    %cst_51 = arith.constant dense<0.000000e+00> : vector<8x32xf32>
    %200 = tpu.matmul %199, %6, %cst_51 {dimension_numbers = #tpu.dot_dimension_numbers<[1], [0], [0], [1], [0, 0, 1, 1], [], []>} : vector<8x8xf32>, vector<8x32xf32>, vector<8x32xf32> -> vector<8x32xf32>
    %201 = arith.addf %197, %200 : vector<8x32xf32>
    %c0_52 = arith.constant 0 : index
    %c2 = arith.constant 2 : index
    %c0_53 = arith.constant 0 : index
    %202 = vector.load %arg1[%c0_52, %c2, %c0_53] : memref<1x13x8xf32, #tpu.memory_space<vmem>>, vector<1x8x8xf32>
    %203 = vector.shape_cast %202 : vector<1x8x8xf32> to vector<8x8xf32>
    %cst_54 = arith.constant dense<0.000000e+00> : vector<8x32xf32>
    %204 = tpu.matmul %203, %7, %cst_54 {dimension_numbers = #tpu.dot_dimension_numbers<[1], [0], [0], [1], [0, 0, 1, 1], [], []>} : vector<8x8xf32>, vector<8x32xf32>, vector<8x32xf32> -> vector<8x32xf32>
    %205 = arith.addf %201, %204 : vector<8x32xf32>
    %c0_55 = arith.constant 0 : index
    %c3 = arith.constant 3 : index
    %c0_56 = arith.constant 0 : index
    %206 = vector.load %arg1[%c0_55, %c3, %c0_56] : memref<1x13x8xf32, #tpu.memory_space<vmem>>, vector<1x8x8xf32>
    %207 = vector.shape_cast %206 : vector<1x8x8xf32> to vector<8x8xf32>
    %cst_57 = arith.constant dense<0.000000e+00> : vector<8x32xf32>
    %208 = tpu.matmul %207, %8, %cst_57 {dimension_numbers = #tpu.dot_dimension_numbers<[1], [0], [0], [1], [0, 0, 1, 1], [], []>} : vector<8x8xf32>, vector<8x32xf32>, vector<8x32xf32> -> vector<8x32xf32>
    %209 = arith.addf %205, %208 : vector<8x32xf32>
    %c0_58 = arith.constant 0 : index
    %c4 = arith.constant 4 : index
    %c0_59 = arith.constant 0 : index
    %210 = vector.load %arg1[%c0_58, %c4, %c0_59] : memref<1x13x8xf32, #tpu.memory_space<vmem>>, vector<1x8x8xf32>
    %211 = vector.shape_cast %210 : vector<1x8x8xf32> to vector<8x8xf32>
    %cst_60 = arith.constant dense<0.000000e+00> : vector<8x32xf32>
    %212 = tpu.matmul %211, %9, %cst_60 {dimension_numbers = #tpu.dot_dimension_numbers<[1], [0], [0], [1], [0, 0, 1, 1], [], []>} : vector<8x8xf32>, vector<8x32xf32>, vector<8x32xf32> -> vector<8x32xf32>
    %213 = arith.addf %209, %212 : vector<8x32xf32>
    %c0_61 = arith.constant 0 : index
    %c5 = arith.constant 5 : index
    %c0_62 = arith.constant 0 : index
    %214 = vector.load %arg1[%c0_61, %c5, %c0_62] : memref<1x13x8xf32, #tpu.memory_space<vmem>>, vector<1x8x8xf32>
    %215 = vector.shape_cast %214 : vector<1x8x8xf32> to vector<8x8xf32>
    %cst_63 = arith.constant dense<0.000000e+00> : vector<8x32xf32>
    %216 = tpu.matmul %215, %10, %cst_63 {dimension_numbers = #tpu.dot_dimension_numbers<[1], [0], [0], [1], [0, 0, 1, 1], [], []>} : vector<8x8xf32>, vector<8x32xf32>, vector<8x32xf32> -> vector<8x32xf32>
    %217 = arith.addf %213, %216 : vector<8x32xf32>
    %c5_i32_64 = arith.constant 5 : i32
    %218 = tpu.dynamic_rotate %217 by %c5_i32_64 dim 0 : vector<8x32xf32>, i32 -> vector<8x32xf32>
    %219 = arith.mulf %218, %27 : vector<8x32xf32>
    %220 = arith.addf %193, %219 : vector<8x32xf32>
    %c4_i32_65 = arith.constant 4 : i32
    %221 = tpu.dynamic_rotate %217 by %c4_i32_65 dim 0 : vector<8x32xf32>, i32 -> vector<8x32xf32>
    %222 = arith.mulf %221, %43 : vector<8x32xf32>
    %223 = arith.addf %220, %222 : vector<8x32xf32>
    %c3_i32_66 = arith.constant 3 : i32
    %224 = tpu.dynamic_rotate %217 by %c3_i32_66 dim 0 : vector<8x32xf32>, i32 -> vector<8x32xf32>
    %225 = arith.mulf %224, %59 : vector<8x32xf32>
    %226 = arith.addf %223, %225 : vector<8x32xf32>
    %c2_i32_67 = arith.constant 2 : i32
    %227 = tpu.dynamic_rotate %217 by %c2_i32_67 dim 0 : vector<8x32xf32>, i32 -> vector<8x32xf32>
    %228 = arith.mulf %227, %75 : vector<8x32xf32>
    %229 = arith.addf %226, %228 : vector<8x32xf32>
    %c1_i32_68 = arith.constant 1 : i32
    %230 = tpu.dynamic_rotate %217 by %c1_i32_68 dim 0 : vector<8x32xf32>, i32 -> vector<8x32xf32>
    %231 = arith.mulf %230, %91 : vector<8x32xf32>
    %232 = arith.addf %229, %231 : vector<8x32xf32>
    %233 = arith.mulf %217, %107 : vector<8x32xf32>
    %234 = arith.addf %232, %233 : vector<8x32xf32>
    %c7_i32 = arith.constant 7 : i32
    %235 = tpu.dynamic_rotate %217 by %c7_i32 dim 0 : vector<8x32xf32>, i32 -> vector<8x32xf32>
    %236 = arith.mulf %235, %123 : vector<8x32xf32>
    %237 = arith.addf %234, %236 : vector<8x32xf32>
    %c6_i32 = arith.constant 6 : i32
    %238 = tpu.dynamic_rotate %217 by %c6_i32 dim 0 : vector<8x32xf32>, i32 -> vector<8x32xf32>
    %239 = arith.mulf %238, %139 : vector<8x32xf32>
    %240 = arith.addf %237, %239 : vector<8x32xf32>
    %c5_i32_69 = arith.constant 5 : i32
    %241 = tpu.dynamic_rotate %217 by %c5_i32_69 dim 0 : vector<8x32xf32>, i32 -> vector<8x32xf32>
    %242 = arith.mulf %241, %155 : vector<8x32xf32>
    %243 = arith.addf %240, %242 : vector<8x32xf32>
    %c4_i32_70 = arith.constant 4 : i32
    %244 = tpu.dynamic_rotate %217 by %c4_i32_70 dim 0 : vector<8x32xf32>, i32 -> vector<8x32xf32>
    %245 = arith.mulf %244, %171 : vector<8x32xf32>
    %246 = arith.addf %243, %245 : vector<8x32xf32>
    %c3_i32_71 = arith.constant 3 : i32
    %247 = tpu.dynamic_rotate %217 by %c3_i32_71 dim 0 : vector<8x32xf32>, i32 -> vector<8x32xf32>
    %248 = arith.mulf %247, %187 : vector<8x32xf32>
    %249 = arith.addf %246, %248 : vector<8x32xf32>
    %250 = arith.negf %249 : vector<8x32xf32>
    %251 = math.exp %250 : vector<8x32xf32>
    %cst_72 = arith.constant 1.000000e+00 : f32
    %252 = vector.broadcast %cst_72 : f32 to vector<8x32xf32>
    %253 = arith.addf %252, %251 : vector<8x32xf32>
    %254 = arith.divf %252, %253 : vector<8x32xf32>
    %255 = arith.mulf %217, %254 : vector<8x32xf32>
    %cst_73 = arith.constant dense<0.000000e+00> : vector<8xf32>
    %256 = vector.multi_reduction <add>, %255, %cst_73 [1] : vector<8x32xf32> to vector<8xf32>
    %257 = vector.shape_cast %256 : vector<8xf32> to vector<8x1xf32>
    %cst_74 = arith.constant 3.200000e+01 : f32
    %258 = vector.broadcast %cst_74 : f32 to vector<8x1xf32>
    %259 = arith.divf %257, %258 : vector<8x1xf32>
    %260 = vector.broadcast %259 : vector<8x1xf32> to vector<8x32xf32>
    %261 = arith.subf %255, %260 : vector<8x32xf32>
    %262 = arith.mulf %261, %261 : vector<8x32xf32>
    %cst_75 = arith.constant dense<0.000000e+00> : vector<8xf32>
    %263 = vector.multi_reduction <add>, %262, %cst_75 [1] : vector<8x32xf32> to vector<8xf32>
    %264 = vector.shape_cast %263 : vector<8xf32> to vector<8x1xf32>
    %cst_76 = arith.constant 3.200000e+01 : f32
    %265 = vector.broadcast %cst_76 : f32 to vector<8x1xf32>
    %266 = arith.divf %264, %265 : vector<8x1xf32>
    %267 = vector.broadcast %259 : vector<8x1xf32> to vector<8x32xf32>
    %268 = arith.subf %255, %267 : vector<8x32xf32>
    %cst_77 = arith.constant 9.99999997E-7 : f32
    %269 = vector.broadcast %cst_77 : f32 to vector<8x1xf32>
    %270 = arith.addf %266, %269 : vector<8x1xf32>
    %271 = math.rsqrt %270 : vector<8x1xf32>
    %272 = vector.broadcast %271 : vector<8x1xf32> to vector<8x32xf32>
    %273 = arith.mulf %268, %272 : vector<8x32xf32>
    %274 = vector.broadcast %3 : vector<1x32xf32> to vector<8x32xf32>
    %275 = arith.mulf %273, %274 : vector<8x32xf32>
    %276 = vector.broadcast %4 : vector<1x32xf32> to vector<8x32xf32>
    %277 = arith.addf %275, %276 : vector<8x32xf32>
    %c0_78 = arith.constant 0 : index
    %c0_79 = arith.constant 0 : index
    %c0_80 = arith.constant 0 : index
    %278 = vector.load %arg3[%c0_78, %c0_79, %c0_80] : memref<1x8x32xf32, #tpu.memory_space<vmem>>, vector<1x8x32xf32>
    %279 = vector.shape_cast %278 : vector<1x8x32xf32> to vector<8x32xf32>
    %280 = vector.shape_cast %277 : vector<8x32xf32> to vector<1x8x32xf32>
    tpu.vector_store %arg3[%c0_78, %c0_79, %c0_80], %280 {strides = array<i32>} : memref<1x8x32xf32, #tpu.memory_space<vmem>>, vector<1x8x32xf32>,
    return
  }
  func.func @transform_0(%arg0: i32) -> (i32, i32, i32) {
    %c0_i32 = arith.constant 0 : i32
    %c0_i32_0 = arith.constant 0 : i32
    %c0_i32_1 = arith.constant 0 : i32
    return %arg0, %c0_i32, %c0_i32_0 : i32, i32, i32
  }
  func.func @transform_1(%arg0: i32) -> (i32, i32) {
    %c0_i32 = arith.constant 0 : i32
    %c0_i32_0 = arith.constant 0 : i32
    %c0_i32_1 = arith.constant 0 : i32
    return %c0_i32, %c0_i32_0 : i32, i32
  }
  func.func @transform_2(%arg0: i32) -> (i32, i32, i32) {
    %c0_i32 = arith.constant 0 : i32
    %c0_i32_0 = arith.constant 0 : i32
    %c0_i32_1 = arith.constant 0 : i32
    return %arg0, %c0_i32, %c0_i32_0 : i32, i32, i32
  }
}

</mosaic_0001>

<llo_original>
// kernel: tpu_custom_call.1
$region0: #{tpu_custom_call.1}
  #allocation0 [shape = 'u32[]', space=smem, size = 0x4, offset = 0x4, fixed_abs, tag = 'smem constant byte address 0x4 - core index']
  #allocation1 [shape = 'u32[72,128]{1,0:T(1,128)}', space=vmem, size = 0x9000, scoped, tag = 'internal scratch']
  %s0 = inlined_call_operand.vmem [shape: f32[2,13,8], index: 0, kind: input, shape index: {}]
  %s1 = inlined_call_operand.vmem [shape: f32[64,32], index: 1, kind: input, shape index: {}]
  %s2 = inlined_call_operand.hbm [shape: f32[2,8,32], index: 2, kind: output, shape index: {}]
  %s3 = sld [smem:[#allocation0]]
  $region41: #{tpu_custom_call.1} parent=0
    _
  %s5 = ssub.s32 1, %s3
  %s6 = scalar_select 0, %s5, %s3
  $region1: #{tpu_custom_call.1} parent=0
    #allocation2 [shape = 'u8[8192]{0}', space=vmem, size = 0x2000, scoped, tag = 'output window, operand 0']
    #allocation3 [shape = 's32[2]{0}', space=sflag, size = 0x8, scoped, tag = 'scoped memory for tpu_custom_call.1']
    %7 = vsyncpa [#allocation3], 0
    %s8 = scalar_lea.sflag [#allocation3], 1
    %9 = vsyncpa %s8, 0
    loop: start=0, step=1, limit=4
    $region2: #{tpu_custom_call.1} parent=1 // loop_pre_header
      _
    $region3: #{tpu_custom_call.1} parent=1 // loop_header
      %s11 = sphi 0, %s15
      %p12 = scmp.ge.s32.totalorder %s11, 4
      %s21 = sphi 0, %s23
      %s24 = sphi 0, %s21
      %s25 = sphi 0, %s24
      %s41 = sphi 0, %s25
      %s45 = sphi 0, %s45
      %s47 = sphi 0, %s45
      %s48 = sphi 0, %s47
      %s62 = sphi 0, %s48
      %s68 = sphi 0, %s70
      %s71 = sphi 0, %s68
      %s72 = sphi 0, %s71
      %s88 = sphi 0, %s72
    $region4: #{tpu_custom_call.1} parent=1 // loop_header_branch
      %14 = sbr.rel (%p12) target = $region8
    $region5: #{tpu_custom_call.1} parent=1 // loop_body
      %s16 = ssub.s32 %s11, 1
      %s17 = ssub.s32 %s11, 2
      %s18 = sadd.s32 %s11, 1
      %s19 = ssub.s32 %s11, %s18
      %p20 = scmp.eq.s32.totalorder %s19, 0
      %s22 = sadd.s32 %s21, 1
      %s23 = scalar_select %p20, %s21, %s22
      %p26 = pneg %p20
      %p27 = scmp.eq.s32.totalorder %s11, 1
      %p28 = por %p26, %p27
      %p29 = scmp.ne.s32.totalorder %s21, %s24
      %p30 = scmp.eq.s32.totalorder %s11, 0
      %p31 = por %p29, %p30
      %p32 = scmp.ne.s32.totalorder %s21, %s24
      %p33 = scmp.eq.s32.totalorder %s16, 1
      %p34 = por %p32, %p33
      %p35 = scmp.ne.s32.totalorder %s24, %s25
      %p36 = scmp.eq.s32.totalorder %s16, 0
      %p37 = por %p35, %p36
      %p38 = scmp.ne.s32.totalorder %s24, %s25
      %p39 = scmp.eq.s32.totalorder %s17, 1
      %p40 = por %p38, %p39
      %p42 = scmp.ne.s32.totalorder %s25, %s41
      %p43 = scmp.eq.s32.totalorder %s17, 0
      %p44 = por %p42, %p43
      %s46 = sadd.s32 %s45, 1
      %p49 = scmp.eq.s32.totalorder %s11, 1
      %p50 = scmp.ne.s32.totalorder %s45, %s47
      %p51 = scmp.eq.s32.totalorder %s11, 0
      %p52 = por %p50, %p51
      %p53 = scmp.ne.s32.totalorder %s45, %s47
      %p54 = scmp.eq.s32.totalorder %s16, 1
      %p55 = por %p53, %p54
      %p56 = scmp.ne.s32.totalorder %s47, %s48
      %p57 = scmp.eq.s32.totalorder %s16, 0
      %p58 = por %p56, %p57
      %p59 = scmp.ne.s32.totalorder %s47, %s48
      %p60 = scmp.eq.s32.totalorder %s17, 1
      %p61 = por %p59, %p60
      %p63 = scmp.ne.s32.totalorder %s48, %s62
      %p64 = scmp.eq.s32.totalorder %s17, 0
      %p65 = por %p63, %p64
      %s66 = ssub.s32 %s11, %s18
      %p67 = scmp.eq.s32.totalorder %s66, 0
      %s69 = sadd.s32 %s68, 1
      %s70 = scalar_select %p67, %s68, %s69
      %p73 = pneg %p67
      %p74 = scmp.eq.s32.totalorder %s11, 1
      %p75 = por %p73, %p74
      %p76 = scmp.ne.s32.totalorder %s68, %s71
      %p77 = scmp.eq.s32.totalorder %s11, 0
      %p78 = por %p76, %p77
      %p79 = scmp.ne.s32.totalorder %s68, %s71
      %p80 = scmp.eq.s32.totalorder %s16, 1
      %p81 = por %p79, %p80
      %p82 = scmp.ne.s32.totalorder %s71, %s72
      %p83 = scmp.eq.s32.totalorder %s16, 0
      %p84 = por %p82, %p83
      %p85 = scmp.ne.s32.totalorder %s71, %s72
      %p86 = scmp.eq.s32.totalorder %s17, 1
      %p87 = por %p85, %p86
      %p89 = scmp.ne.s32.totalorder %s72, %s88
      %p90 = scmp.eq.s32.totalorder %s17, 0
      %p91 = por %p89, %p90
      %p92 = scmp.le.s32.totalorder 1, %s11
      %p93 = scmp.lt.s32.totalorder %s11, 3
      %p94 = pnand %p92, %p93
      %p95 = pneg %p94
      // Predicated region
      $region9: #{tpu_custom_call.1} parent=5 // pred_check
        _
      $region10: #{tpu_custom_call.1} parent=5 // pred_check_branch
        %97 = sbr.rel (%p94) target = $region12
      $region11: #{tpu_custom_call.1} parent=5 // pred_region
        %s98 = ssub.s32 %s11, 1
        // Predicated region
        $region13: #{tpu_custom_call.1} parent=11 // pred_check
          %p99 = pneg %p58
        $region14: #{tpu_custom_call.1} parent=11 // pred_check_branch
          %101 = sbr.rel (%p99) target = $region16
        $region15: #{tpu_custom_call.1} parent=11 // pred_region
          _
        $region16: #{tpu_custom_call.1} parent=11 // pred_fallthru
          _
      $region12: #{tpu_custom_call.1} parent=5 // pred_fallthru
        _
      %p102 = scmp.lt.s32.totalorder %s11, 2
      // Predicated region
      $region17: #{tpu_custom_call.1} parent=5 // pred_check
        %p103 = pneg %p102
      $region18: #{tpu_custom_call.1} parent=5 // pred_check_branch
        %105 = sbr.rel (%p103) target = $region20
      $region19: #{tpu_custom_call.1} parent=5 // pred_region
        // Predicated region
        $region21: #{tpu_custom_call.1} parent=19 // pred_check
          %p106 = pneg %p31
        $region22: #{tpu_custom_call.1} parent=19 // pred_check_branch
          %108 = sbr.rel (%p106) target = $region24
        $region23: #{tpu_custom_call.1} parent=19 // pred_region
          %p109 = scmp.lt.s32.totalorder %s11, 1
          %s110 = scalar_select %p109, %s11, 1
          %s111 = smul.addr %s110, 2
          %s112 = smul.addr %s111, 8
          %s113 = scalar_lea.vmem %s0, %s112
        $region24: #{tpu_custom_call.1} parent=19 // pred_fallthru
          _
      $region20: #{tpu_custom_call.1} parent=5 // pred_fallthru
        _
      %p114 = scmp.le.s32.totalorder 1, %s11
      %p115 = scmp.lt.s32.totalorder %s11, 3
      %p116 = pnand %p114, %p115
      %p117 = pneg %p116
      // Predicated region
      $region25: #{tpu_custom_call.1} parent=5 // pred_check
        _
      $region26: #{tpu_custom_call.1} parent=5 // pred_check_branch
        %119 = sbr.rel (%p116) target = $region28
      $region27: #{tpu_custom_call.1} parent=5 // pred_region
        %s120 = ssub.s32 %s11, 1
        %p121 = scmp.lt.s32.totalorder %s16, 1
        %s122 = scalar_select %p121, %s16, 1
        %s123 = smul.addr %s122, 2
        %s124 = smul.addr %s123, 8
        %s125 = scalar_lea.vmem %s0, %s124
        %p126 = pneg %p37
        %p127 = pneg %p34
        %p128 = pneg %p58
        %p129 = pneg %p55
        %p130 = pneg %p84
        %p131 = pneg %p81
        %s132 = sand.u32 %s71, 1
        %s133 = scalar_lea.sflag [#allocation3], %s132
        %s134 = sand.u32 %s71, 1
        %s135 = smul.addr %s134, 8
        %s136 = scalar_lea.vmem [#allocation2], %s135
        %p137 = scmp.lt.s32.totalorder %s16, 1
        %s138 = scalar_select %p137, %s16, 1
        %s139 = smul.addr %s138, 2
        %s140 = smul.addr %s139, 8
        %s141 = scalar_lea.vmem %s0, %s140
        %v142 = vld [vmem:[%s1] sm:$0xff]
        %v143 = vld [vmem:[%s1 + $0x8] sm:$0xff]
        %v144 = vld [vmem:[%s1 + $0x10] sm:$0xff]
        %v145 = vld [vmem:[%s1 + $0x18] sm:$0xff]
        %v146 = vld [vmem:[%s1 + $0x20] sm:$0xff]
        %v147 = vld [vmem:[%s1 + $0x28] sm:$0xff]
        %v148 = vld [vmem:[%s1 + $0x30] sm:$0xff]
        %v149 = vld [vmem:[%s1 + $0x38] sm:$0xff]
        %v150 = vlaneseq
        %v151 = vshrl.u32 %v150, 7
        %v152 = vadd.s32 %v151, 4294967291
        %vm153 = vcmp.ge.s32.totalorder %v152, 0
        %vm154 = vcmp.lt.s32.totalorder %v152, 8
        %vm155 = vmand %vm153, %vm154
        %v156 = vsel %vm155, 1, 0
        %vm157 = vcmp.eq.s32.totalorder %v156, 1
        %v158 = vperm.slane %v148, 1
        %v159 = vsel %vm157, %v158, 0.0
        %v160 = vadd.s32 %v151, 4294967292
        %vm161 = vcmp.ge.s32.totalorder %v160, 0
        %vm162 = vcmp.lt.s32.totalorder %v160, 8
        %vm163 = vmand %vm161, %vm162
        %v164 = vsel %vm163, 1, 0
        %vm165 = vcmp.eq.s32.totalorder %v164, 1
        %v166 = vperm.slane %v148, 2
        %v167 = vsel %vm165, %v166, 0.0
        %v168 = vadd.s32 %v151, 4294967293
        %vm169 = vcmp.ge.s32.totalorder %v168, 0
        %vm170 = vcmp.lt.s32.totalorder %v168, 8
        %vm171 = vmand %vm169, %vm170
        %v172 = vsel %vm171, 1, 0
        %vm173 = vcmp.eq.s32.totalorder %v172, 1
        %v174 = vperm.slane %v148, 3
        %v175 = vsel %vm173, %v174, 0.0
        %v176 = vadd.s32 %v151, 4294967294
        %vm177 = vcmp.ge.s32.totalorder %v176, 0
        %vm178 = vcmp.lt.s32.totalorder %v176, 8
        %vm179 = vmand %vm177, %vm178
        %v180 = vsel %vm179, 1, 0
        %vm181 = vcmp.eq.s32.totalorder %v180, 1
        %v182 = vperm.slane %v148, 4
        %v183 = vsel %vm181, %v182, 0.0
        %v184 = vadd.s32 %v151, 4294967295
        %vm185 = vcmp.ge.s32.totalorder %v184, 0
        %vm186 = vcmp.lt.s32.totalorder %v184, 8
        %vm187 = vmand %vm185, %vm186
        %v188 = vsel %vm187, 1, 0
        %vm189 = vcmp.eq.s32.totalorder %v188, 1
        %v190 = vperm.slane %v148, 5
        %v191 = vsel %vm189, %v190, 0.0
        %vm192 = vcmp.ge.s32.totalorder %v151, 0
        %vm193 = vcmp.lt.s32.totalorder %v151, 8
        %vm194 = vmand %vm192, %vm193
        %v195 = vsel %vm194, 1, 0
        %vm196 = vcmp.eq.s32.totalorder %v195, 1
        %v197 = vperm.slane %v148, 6
        %v198 = vsel %vm196, %v197, 0.0
        %v199 = vadd.s32 %v151, 1
        %vm200 = vcmp.ge.s32.totalorder %v199, 0
        %vm201 = vcmp.lt.s32.totalorder %v199, 8
        %vm202 = vmand %vm200, %vm201
        %v203 = vsel %vm202, 1, 0
        %vm204 = vcmp.eq.s32.totalorder %v203, 1
        %v205 = vperm.slane %v148, 7
        %v206 = vsel %vm204, %v205, 0.0
        %v207 = vadd.s32 %v151, 2
        %vm208 = vcmp.ge.s32.totalorder %v207, 0
        %vm209 = vcmp.lt.s32.totalorder %v207, 8
        %vm210 = vmand %vm208, %vm209
        %v211 = vsel %vm210, 1, 0
        %vm212 = vcmp.eq.s32.totalorder %v211, 1
        %v213 = vperm.slane %v149, 0
        %v214 = vsel %vm212, %v213, 0.0
        %v215 = vadd.s32 %v151, 3
        %vm216 = vcmp.ge.s32.totalorder %v215, 0
        %vm217 = vcmp.lt.s32.totalorder %v215, 8
        %vm218 = vmand %vm216, %vm217
        %v219 = vsel %vm218, 1, 0
        %vm220 = vcmp.eq.s32.totalorder %v219, 1
        %v221 = vperm.slane %v149, 1
        %v222 = vsel %vm220, %v221, 0.0
        %v223 = vadd.s32 %v151, 4
        %vm224 = vcmp.ge.s32.totalorder %v223, 0
        %vm225 = vcmp.lt.s32.totalorder %v223, 8
        %vm226 = vmand %vm224, %vm225
        %v227 = vsel %vm226, 1, 0
        %vm228 = vcmp.eq.s32.totalorder %v227, 1
        %v229 = vperm.slane %v149, 2
        %v230 = vsel %vm228, %v229, 0.0
        %v231 = vadd.s32 %v151, 5
        %vm232 = vcmp.ge.s32.totalorder %v231, 0
        %vm233 = vcmp.lt.s32.totalorder %v231, 8
        %vm234 = vmand %vm232, %vm233
        %v235 = vsel %vm234, 1, 0
        %vm236 = vcmp.eq.s32.totalorder %v235, 1
        %v237 = vperm.slane %v149, 3
        %v238 = vsel %vm236, %v237, 0.0
        %v239 = vperm.slane %v148, 0
        %v240 = vadd.f32 %v239, 0.0
        %v241 = vperm.slane %v149, 4
        %v242 = vadd.f32 %v241, 0.0
        %v243 = vld [vmem:[%s141] sm:$0xff]
        %vm244 = vcmask 64512
        %v246 = vsel %vm244, %v243, 0
        %248 = vmatpush.msra.mxu0 0.0
        %249 = vmatpush.msra.mxu0 0.0
        %250 = vmatpush.msra.mxu0 0.0
        %251 = vmatpush.msra.mxu0 0.0
        %252 = vmatpush.msra.mxu0 0.0
        %253 = vmatpush.msra.mxu0 0.0
        %254 = vmatpush.msra.mxu0 0.0
        %255 = vmatpush.msra.mxu0 0.0
        %256 = vmatpush.msra.mxu0 0.0
        %257 = vmatpush.msra.mxu0 0.0
        %258 = vmatpush.msra.mxu0 0.0
        %259 = vmatpush.msra.mxu0 0.0
        %260 = vmatpush.msra.mxu0 0.0
        %261 = vmatpush.msra.mxu0 0.0
        %262 = vmatpush.msra.mxu0 0.0
        %263 = vmatpush.msra.mxu0 %v142
        %264 = vmatmul.f32.gmra.mxu0 %v246
        %v265 = vpop.f32.mrf.mxu0
        %v266 = vadd.f32 0.0, %v265
        %267 = vdwg.mxu0
        %v268 = vadd.f32 %v240, %v266
        %v269 = vld [vmem:[%s141 + $0x1] sm:$0xff]
        %v271 = vsel %vm244, %v269, 0
        %273 = vmatpush.msra.mxu0 0.0
        %274 = vmatpush.msra.mxu0 0.0
        %275 = vmatpush.msra.mxu0 0.0
        %276 = vmatpush.msra.mxu0 0.0
        %277 = vmatpush.msra.mxu0 0.0
        %278 = vmatpush.msra.mxu0 0.0
        %279 = vmatpush.msra.mxu0 0.0
        %280 = vmatpush.msra.mxu0 0.0
        %281 = vmatpush.msra.mxu0 0.0
        %282 = vmatpush.msra.mxu0 0.0
        %283 = vmatpush.msra.mxu0 0.0
        %284 = vmatpush.msra.mxu0 0.0
        %285 = vmatpush.msra.mxu0 0.0
        %286 = vmatpush.msra.mxu0 0.0
        %287 = vmatpush.msra.mxu0 0.0
        %288 = vmatpush.msra.mxu0 %v143
        %289 = vmatmul.f32.gmra.mxu0 %v271
        %v290 = vpop.f32.mrf.mxu0
        %v291 = vadd.f32 0.0, %v290
        %292 = vdwg.mxu0
        %v293 = vadd.f32 %v268, %v291
        %v294 = vld [vmem:[%s141 + $0x2] sm:$0xff]
        %v296 = vsel %vm244, %v294, 0
        %298 = vmatpush.msra.mxu0 0.0
        %299 = vmatpush.msra.mxu0 0.0
        %300 = vmatpush.msra.mxu0 0.0
        %301 = vmatpush.msra.mxu0 0.0
        %302 = vmatpush.msra.mxu0 0.0
        %303 = vmatpush.msra.mxu0 0.0
        %304 = vmatpush.msra.mxu0 0.0
        %305 = vmatpush.msra.mxu0 0.0
        %306 = vmatpush.msra.mxu0 0.0
        %307 = vmatpush.msra.mxu0 0.0
        %308 = vmatpush.msra.mxu0 0.0
        %309 = vmatpush.msra.mxu0 0.0
        %310 = vmatpush.msra.mxu0 0.0
        %311 = vmatpush.msra.mxu0 0.0
        %312 = vmatpush.msra.mxu0 0.0
        %313 = vmatpush.msra.mxu0 %v144
        %314 = vmatmul.f32.gmra.mxu0 %v296
        %v315 = vpop.f32.mrf.mxu0
        %v316 = vadd.f32 0.0, %v315
        %317 = vdwg.mxu0
        %v318 = vadd.f32 %v293, %v316
        %v319 = vld [vmem:[%s141 + $0x3] sm:$0xff]
        %v321 = vsel %vm244, %v319, 0
        %323 = vmatpush.msra.mxu0 0.0
        %324 = vmatpush.msra.mxu0 0.0
        %325 = vmatpush.msra.mxu0 0.0
        %326 = vmatpush.msra.mxu0 0.0
        %327 = vmatpush.msra.mxu0 0.0
        %328 = vmatpush.msra.mxu0 0.0
        %329 = vmatpush.msra.mxu0 0.0
        %330 = vmatpush.msra.mxu0 0.0
        %331 = vmatpush.msra.mxu0 0.0
        %332 = vmatpush.msra.mxu0 0.0
        %333 = vmatpush.msra.mxu0 0.0
        %334 = vmatpush.msra.mxu0 0.0
        %335 = vmatpush.msra.mxu0 0.0
        %336 = vmatpush.msra.mxu0 0.0
        %337 = vmatpush.msra.mxu0 0.0
        %338 = vmatpush.msra.mxu0 %v145
        %339 = vmatmul.f32.gmra.mxu0 %v321
        %v340 = vpop.f32.mrf.mxu0
        %v341 = vadd.f32 0.0, %v340
        %342 = vdwg.mxu0
        %v343 = vadd.f32 %v318, %v341
        %v344 = vld [vmem:[%s141 + $0x4] sm:$0xff]
        %v346 = vsel %vm244, %v344, 0
        %348 = vmatpush.msra.mxu0 0.0
        %349 = vmatpush.msra.mxu0 0.0
        %350 = vmatpush.msra.mxu0 0.0
        %351 = vmatpush.msra.mxu0 0.0
        %352 = vmatpush.msra.mxu0 0.0
        %353 = vmatpush.msra.mxu0 0.0
        %354 = vmatpush.msra.mxu0 0.0
        %355 = vmatpush.msra.mxu0 0.0
        %356 = vmatpush.msra.mxu0 0.0
        %357 = vmatpush.msra.mxu0 0.0
        %358 = vmatpush.msra.mxu0 0.0
        %359 = vmatpush.msra.mxu0 0.0
        %360 = vmatpush.msra.mxu0 0.0
        %361 = vmatpush.msra.mxu0 0.0
        %362 = vmatpush.msra.mxu0 0.0
        %363 = vmatpush.msra.mxu0 %v146
        %364 = vmatmul.f32.gmra.mxu0 %v346
        %v365 = vpop.f32.mrf.mxu0
        %v366 = vadd.f32 0.0, %v365
        %367 = vdwg.mxu0
        %v368 = vadd.f32 %v343, %v366
        %v369 = vld [vmem:[%s141 + $0x5] sm:$0xff]
        %v371 = vsel %vm244, %v369, 0
        %373 = vmatpush.msra.mxu0 0.0
        %374 = vmatpush.msra.mxu0 0.0
        %375 = vmatpush.msra.mxu0 0.0
        %376 = vmatpush.msra.mxu0 0.0
        %377 = vmatpush.msra.mxu0 0.0
        %378 = vmatpush.msra.mxu0 0.0
        %379 = vmatpush.msra.mxu0 0.0
        %380 = vmatpush.msra.mxu0 0.0
        %381 = vmatpush.msra.mxu0 0.0
        %382 = vmatpush.msra.mxu0 0.0
        %383 = vmatpush.msra.mxu0 0.0
        %384 = vmatpush.msra.mxu0 0.0
        %385 = vmatpush.msra.mxu0 0.0
        %386 = vmatpush.msra.mxu0 0.0
        %387 = vmatpush.msra.mxu0 0.0
        %388 = vmatpush.msra.mxu0 %v147
        %389 = vmatmul.f32.gmra.mxu0 %v371
        %v390 = vpop.f32.mrf.mxu0
        %v391 = vadd.f32 0.0, %v390
        %392 = vdwg.mxu0
        %v393 = vadd.f32 %v368, %v391
        %v394 = vrot.slane %v393, 3
        %v395 = vmul.f32 %v394, %v159
        %v396 = vadd.f32 %v242, %v395
        %v397 = vrot.slane %v393, 4
        %v398 = vmul.f32 %v397, %v167
        %v399 = vadd.f32 %v396, %v398
        %v400 = vrot.slane %v393, 5
        %v401 = vmul.f32 %v400, %v175
        %v402 = vadd.f32 %v399, %v401
        %v403 = vrot.slane %v393, 6
        %v404 = vmul.f32 %v403, %v183
        %v405 = vadd.f32 %v402, %v404
        %v406 = vrot.slane %v393, 7
        %v407 = vmul.f32 %v406, %v191
        %v408 = vadd.f32 %v405, %v407
        %v409 = vmul.f32 %v393, %v198
        %v410 = vadd.f32 %v408, %v409
        %v411 = vrot.slane %v393, 1
        %v412 = vmul.f32 %v411, %v206
        %v413 = vadd.f32 %v410, %v412
        %v414 = vrot.slane %v393, 2
        %v415 = vmul.f32 %v414, %v214
        %v416 = vadd.f32 %v413, %v415
        %v417 = vmul.f32 %v394, %v222
        %v418 = vadd.f32 %v416, %v417
        %v419 = vmul.f32 %v397, %v230
        %v420 = vadd.f32 %v418, %v419
        %v421 = vmul.f32 %v400, %v238
        %v422 = vadd.f32 %v420, %v421
        %v423 = vxor.u32 %v422, 2147483648
        %v424 = vmul.f32 %v423, 1.442695
        %v425 = vpow.pop %v424
        %v426 = vadd.f32 %v425, 1.0
        %v427 = vrcp.pop %v426
        %v428 = vmul.f32 %v426, %v427
        %v429 = vsub.f32 1.0, %v428
        %v430 = vmul.f32 %v427, %v429
        %v431 = vadd.f32 %v427, %v430
        %vm432 = vweird.f32 %v426
        %vm433 = vweird.f32 %v427
        %vm434 = vmor %vm432, %vm433
        %v435 = vsel %vm434, %v427, %v431
        %v436 = vand.u32 2147483647, %v426
        %vm437 = vcmp.eq.f32.partialorder %v436, 8.507059e+37
        %v438 = vand.u32 %v426, 2147483648
        %v439 = vor.u32 1.1754944e-38, %v438
        %v440 = vsel %vm437, %v439, %v435
        %v441 = vmul.f32 1.0, %v440
        %v442 = vmul.f32 %v393, %v441
        %vm443 = vcmask 261120
        %v444 = vsel %vm443, %v442, 0.0
        %445 = vadd.xlane.f32.xlu0 %v444
        %v446 = vpop.xlane.xlu0 %445
        %v447 = vrcp.pop 32.0
        %v448 = vmul.f32 32.0, %v447
        %v449 = vsub.f32 1.0, %v448
        %v450 = vmul.f32 %v447, %v449
        %v451 = vadd.f32 %v447, %v450
        %vm452 = vweird.f32 %v447
        %v453 = vsel %vm452, %v447, %v451
        %v454 = vmul.f32 %v446, %v453
        %v455 = vsub.f32 %v442, %v454
        %v456 = vmul.f32 %v455, %v455
        %v457 = vsel %vm443, %v456, 0.0
        %458 = vadd.xlane.f32.xlu0 %v457
        %v459 = vpop.xlane.xlu0 %458
        %v460 = vmul.f32 %v459, %v453
        %v461 = vadd.f32 %v460, 1e-06
        %v462 = vrsqrt.pop %v461
        %v463 = vmul.f32 %v462, %v461
        %v464 = vmul.f32 %v463, %v462
        %v465 = vmul.f32 0.5, %v464
        %v466 = vsub.f32 1.5, %v465
        %v467 = vmul.f32 %v462, %v466
        %vm468 = vweird.f32 %v461
        %vm469 = vweird.f32 %v462
        %vm470 = vmor %vm468, %vm469
        %v471 = vsel %vm470, %v462, %v467
        %v472 = vmul.f32 %v455, %v471
        %v473 = vperm.slane %v149, 5
        %v474 = vmul.f32 %v472, %v473
        %v475 = vperm.slane %v149, 6
        %v476 = vadd.f32 %v474, %v475
        %477 = vst.msk [vmem:[%s136] sm:$0xff] %vm443, %v476
        %s478 = sand.u32 %s71, 1
        %s479 = scalar_lea.sflag [#allocation3], %s478
        %s480 = sand.u32 %s71, 1
        %s481 = smul.addr %s480, 8
        %s482 = scalar_lea.vmem [#allocation2], %s481
        // Predicated region
        $region29: #{tpu_custom_call.1} parent=27 // pred_check
          %p483 = pneg %p81
        $region30: #{tpu_custom_call.1} parent=27 // pred_check_branch
          %485 = sbr.rel (%p483) target = $region32
        $region31: #{tpu_custom_call.1} parent=27 // pred_region
          %487 = vsyncadd %s479, 0
          %s488 = smul.addr %s16, 8
          %s489 = scalar_lea.hbm %s2, %s488
          %s491 = sshll.u32 %s482, 4
          %s492 = int_to_ptr.vmem [resolvable:$true] %s491
          %s493 = sshll.u32 %s489, 4
          %s494 = int_to_ptr.hbm [resolvable:$true] %s493
          %496 = dma.vmem_to_hbm [thread:$0]  %s492, 128, %s494, %s479
        $region32: #{tpu_custom_call.1} parent=27 // pred_fallthru
          _
      $region28: #{tpu_custom_call.1} parent=5 // pred_fallthru
        _
      %p497 = scmp.le.s32.totalorder 2, %s11
      // Predicated region
      $region33: #{tpu_custom_call.1} parent=5 // pred_check
        %p498 = pneg %p497
      $region34: #{tpu_custom_call.1} parent=5 // pred_check_branch
        %500 = sbr.rel (%p498) target = $region36
      $region35: #{tpu_custom_call.1} parent=5 // pred_region
        %s501 = ssub.s32 %s11, 2
        // Predicated region
        $region37: #{tpu_custom_call.1} parent=35 // pred_check
          %p502 = pneg %p87
        $region38: #{tpu_custom_call.1} parent=35 // pred_check_branch
          %504 = sbr.rel (%p502) target = $region40
        $region39: #{tpu_custom_call.1} parent=35 // pred_region
          %s505 = sand.u32 %s72, 1
          %s506 = scalar_lea.sflag [#allocation3], %s505
          %s507 = sand.u32 %s72, 1
          %s508 = smul.addr %s507, 8
          %s509 = scalar_lea.vmem [#allocation2], %s508
          %511 = dma.done %s506, 128
        $region40: #{tpu_custom_call.1} parent=35 // pred_fallthru
          _
      $region36: #{tpu_custom_call.1} parent=5 // pred_fallthru
        _
    $region6: #{tpu_custom_call.1} parent=1 // loop_footer
      %s15 = sadd.s32 1, %s11
    $region7: #{tpu_custom_call.1} parent=1 // loop_footer_branch
      %10 = sbr.rel target = $region3
    $region8: #{tpu_custom_call.1} parent=1 // loop_exit
      _
    %512 = vsyncpa [#allocation3], 1
    %s513 = scalar_lea.sflag [#allocation3], 1
    %514 = vsyncpa %s513, 1

</llo_original>
